<compile_context>
chip_gen: v7x
topology: tpu7x:2x2x1
jax: 0.10.0
libtpu: 0.0.40
codegen_flags: <defaults>
</compile_context>

<pallas_src>
import jax
import jax.numpy as jnp
from jax.experimental import pallas as pl
from jax.experimental.pallas import tpu as pltpu

BLOCK_SIZE = 8   # T (blockSiz in the PyTorch code)
N_EMB = 32       # C (nEmb)
HEAD_SIZ = 16    # headSiz


def _head_kernel(x_ref, w_ref, o_ref):
    # x_ref: (BB*T, C)  -- BB batch elements with the sequence dim flattened into rows
    # w_ref: (C, 3H)    -- fused [Wk | Wq | Wv]
    # o_ref: (BB, T*H)  -- lane-dense output block (T*H == 128)
    x2d = x_ref[...]                       # (BB*T, C)
    w_qkv = w_ref[...]                     # (C, 3H)

    C = x2d.shape[1]
    H = w_qkv.shape[1] // 3
    BB = o_ref.shape[0]
    T = x2d.shape[0] // BB

    # Single fused projection matmul: one MXU push instead of three tiny ones.
    qkv = jnp.dot(x2d, w_qkv, preferred_element_type=jnp.float32)    # (BB*T, 3H)

    # Tile-aligned split of the row dim (T == 8 == sublane tile) back into (batch, seq).
    qkv3 = qkv.reshape(BB, T, 3 * H)                                  # (BB, T, 3H)
    k = qkv3[:, :, 0 * H:1 * H]                                       # (BB, T, H)
    q = qkv3[:, :, 1 * H:2 * H]
    v = qkv3[:, :, 2 * H:3 * H]

    scale = jnp.float32(C) ** jnp.float32(-0.5)   # C ** -0.5, exactly as in the PyTorch module

    # Batched q @ k^T, contracting the head dim directly (no explicit transpose of k).
    scores = jnp.einsum('bqh,bkh->bqk', q, k,
                        preferred_element_type=jnp.float32) * scale   # (BB, T, T)

    # Causal mask: built once, broadcast over the BB batch rows.
    row = jax.lax.broadcasted_iota(jnp.int32, (T, T), 0)
    col = jax.lax.broadcasted_iota(jnp.int32, (T, T), 1)
    keep = (col <= row)[None, :, :]                                   # (1, T, T)
    # Large negative finite instead of -inf: identical result here (diagonal is never
    # masked) but NaN-safe if a fully-masked row ever appears.
    scores = jnp.where(keep, scores, jnp.float32(-1e30))

    # Numerically stable softmax; reciprocal runs on the otherwise-idle EUP slot.
    s_max = jnp.max(scores, axis=-1, keepdims=True)
    s_exp = jnp.exp(scores - s_max)
    s_sum = jnp.sum(s_exp, axis=-1, keepdims=True)
    attn = s_exp * pl.reciprocal(s_sum, approx=True)                  # (BB, T, T)

    out = jnp.einsum('bqk,bkh->bqh', attn, v,
                     preferred_element_type=jnp.float32)              # (BB, T, H)
    out = out.astype(o_ref.dtype)

    # Store into the lane-dense (BB, T*H) block. Static, fully unrolled per-t stores keep
    # the lowering trivial while the output VMEM block / HBM writeback stay 128-lane dense.
    for t in range(T):
        o_ref[:, t * H:(t + 1) * H] = out[:, t, :]


def _pick_block_batch(B, max_bb=64):
    """Batch elements per grid step: as large as possible (<= max_bb) while dividing B.

    If the grid has more than one step, the output block's second-minor dim (BB) must be a
    multiple of 8 (sublane tiling); otherwise fall back to a single big step (VMEM is tiny
    at these row sizes, well within even v7x's 64 MiB).
    """
    if B <= max_bb:
        return B
    for bb in range(max_bb, 7, -1):
        if B % bb == 0 and bb % 8 == 0:
            return bb
    return B


def head_forward(x, wk, wq, wv, *, max_block_batch=64):
    """x: (B, T, C) f32; wk/wq/wv: (C, H) f32 stored for x @ W  ->  (B, T, H)."""
    B, T, C = x.shape
    H = wk.shape[1]

    bb = _pick_block_batch(B, max_block_batch)
    grid = (B // bb,)

    # Fused QKV weight: one (C, 3H) MXU operand instead of three (C, H) ones.
    w_qkv = jnp.concatenate([wk, wq, wv], axis=1)                    # (C, 3H)

    # Flatten batch and sequence so each grid step's projections are one 2-D matmul (free reshape).
    x2d = x.reshape(B * T, C)

    out_flat = pl.pallas_call(
        _head_kernel,
        out_shape=jax.ShapeDtypeStruct((B, T * H), x.dtype),         # lane-dense: T*H == 128
        grid_spec=pltpu.PrefetchScalarGridSpec(
            num_scalar_prefetch=0,
            grid=grid,
            in_specs=[
                pl.BlockSpec((bb * T, C), lambda i: (i, 0)),         # bb batch elements of x
                pl.BlockSpec((C, 3 * H), lambda i: (0, 0)),          # fused weights (block-invariant)
            ],
            out_specs=pl.BlockSpec((bb, T * H), lambda i: (i, 0)),
        ),
        compiler_params=pltpu.CompilerParams(
            dimension_semantics=("parallel",),   # independent steps; shards across TCs on v7x
        ),
    )(x2d, w_qkv)

    return out_flat.reshape(B, T, H)


def head_reference(x, wk, wq, wv):
    """Pure-JAX reference mirroring the PyTorch forward."""
    B, T, C = x.shape
    k = x @ wk
    q = x @ wq
    v = x @ wv
    w = (q @ jnp.swapaxes(k, -2, -1)) * (C ** -0.5)
    tril = jnp.tril(jnp.ones((T, T)))
    w = jnp.where(tril == 0, -jnp.inf, w)
    w = jax.nn.softmax(w, axis=-1)
    return w @ v


if __name__ == "__main__":
    key = jax.random.PRNGKey(0)
    kx, kk, kq, kv = jax.random.split(key, 4)

    B, T, C, H = 2, BLOCK_SIZE, N_EMB, HEAD_SIZ

    x = jax.random.normal(kx, (B, T, C), dtype=jnp.float32)
    # Deterministic "nn.Linear(nEmb, headSiz, bias=False)"-like params, stored transposed
    # as (C, H) for direct x @ W use.
    wk = jax.random.normal(kk, (C, H), dtype=jnp.float32) * (C ** -0.5)
    wq = jax.random.normal(kq, (C, H), dtype=jnp.float32) * (C ** -0.5)
    wv = jax.random.normal(kv, (C, H), dtype=jnp.float32) * (C ** -0.5)

    out = head_forward(x, wk, wq, wv)
    out = jax.block_until_ready(out)

    ref = head_reference(x, wk, wq, wv)
    assert out.shape == (B, T, H), out.shape
    # Tolerance accounts for the approximate EUP reciprocal used in the softmax denominator.
    assert jnp.allclose(out, ref, atol=5e-3, rtol=5e-3), float(jnp.max(jnp.abs(out - ref)))

    print("KERNEL_OK")
</pallas_src>

<mosaic_0001>
module attributes {stable_mosaic.version = 11 : i64} {
  func.func @_head_kernel(%arg0: i32, %arg1: memref<16x32xf32, #tpu.memory_space<vmem>>, %arg2: memref<32x48xf32, #tpu.memory_space<vmem>>, %arg3: memref<2x128xf32, #tpu.memory_space<vmem>>) attributes {dimension_semantics = [#tpu.dimension_semantics<parallel>], iteration_bounds = array<i64: 1>, scalar_prefetch = 0 : i64, scratch_operands = 0 : i64, tpu.core_type = #tpu.core_type<tc>, window_params = [{transform_indices = @transform_0, window_bounds = array<i64: 16, 32>}, {pipeline_mode = #tpu.pipeline_mode<synchronous>, transform_indices = @transform_1, window_bounds = array<i64: 32, 48>}, {transform_indices = @transform_2, window_bounds = array<i64: 2, 128>}]} {
    %c0 = arith.constant 0 : index
    %c0_0 = arith.constant 0 : index
    %0 = vector.load %arg1[%c0, %c0_0] : memref<16x32xf32, #tpu.memory_space<vmem>>, vector<16x32xf32>
    %c0_1 = arith.constant 0 : index
    %c0_2 = arith.constant 0 : index
    %1 = vector.load %arg2[%c0_1, %c0_2] : memref<32x48xf32, #tpu.memory_space<vmem>>, vector<32x48xf32>
    %cst = arith.constant dense<0.000000e+00> : vector<16x48xf32>
    %2 = tpu.matmul %0, %1, %cst {dimension_numbers = #tpu.dot_dimension_numbers<[1], [0], [0], [1], [0, 0, 1, 1], [], []>} : vector<16x32xf32>, vector<32x48xf32>, vector<16x48xf32> -> vector<16x48xf32>
    %3 = vector.shape_cast %2 : vector<16x48xf32> to vector<2x8x48xf32>
    %4 = vector.extract_strided_slice %3 {offsets = [0, 0, 0], sizes = [2, 8, 16], strides = [1, 1, 1]} : vector<2x8x48xf32> to vector<2x8x16xf32>
    %5 = vector.extract_strided_slice %3 {offsets = [0, 0, 16], sizes = [2, 8, 16], strides = [1, 1, 1]} : vector<2x8x48xf32> to vector<2x8x16xf32>
    %6 = vector.extract_strided_slice %3 {offsets = [0, 0, 32], sizes = [2, 8, 16], strides = [1, 1, 1]} : vector<2x8x48xf32> to vector<2x8x16xf32>
    %cst_3 = arith.constant 3.200000e+01 : f32
    %cst_4 = arith.constant -5.000000e-01 : f32
    %7 = math.powf %cst_3, %cst_4 : f32
    "tpu.trace_start"() <{level = 10 : i32, message = "bqh,bkh->bqk"}> : () -> ()
    %cst_5 = arith.constant dense<0.000000e+00> : vector<2x8x8xf32>
    %8 = tpu.matmul %5, %4, %cst_5 {dimension_numbers = #tpu.dot_dimension_numbers<[2], [2], [1], [1], [0, 0, 0, 1, 1, 1], [0], [0]>} : vector<2x8x16xf32>, vector<2x8x16xf32>, vector<2x8x8xf32> -> vector<2x8x8xf32>
    "tpu.trace_stop"() : () -> ()
    %9 = vector.broadcast %7 : f32 to vector<2x8x8xf32>
    %10 = arith.mulf %8, %9 : vector<2x8x8xf32>
    %11 = tpu.iota {dimensions = array<i32: 0>} : vector<8x8xi32>
    %12 = tpu.iota {dimensions = array<i32: 1>} : vector<8x8xi32>
    %13 = arith.cmpi sle, %12, %11 : vector<8x8xi32>
    %14 = vector.shape_cast %13 : vector<8x8xi1> to vector<1x8x8xi1>
    %cst_6 = arith.constant -1.000000e+30 : f32
    %15 = vector.shape_cast %14 : vector<1x8x8xi1> to vector<1x8x8xi1>
    %16 = vector.broadcast %15 : vector<1x8x8xi1> to vector<2x8x8xi1>
    %17 = vector.broadcast %cst_6 : f32 to vector<2x8x8xf32>
    %18 = arith.select %16, %10, %17 : vector<2x8x8xi1>, vector<2x8x8xf32>
    %cst_7 = arith.constant dense<0xFF800000> : vector<2x8xf32>
    %19 = vector.multi_reduction <maximumf>, %18, %cst_7 [2] : vector<2x8x8xf32> to vector<2x8xf32>
    %20 = vector.shape_cast %19 : vector<2x8xf32> to vector<2x8x1xf32>
    %21 = vector.broadcast %20 : vector<2x8x1xf32> to vector<2x8x8xf32>
    %22 = arith.subf %18, %21 : vector<2x8x8xf32>
    %23 = math.exp %22 : vector<2x8x8xf32>
    %cst_8 = arith.constant dense<0.000000e+00> : vector<2x8xf32>
    %24 = vector.multi_reduction <add>, %23, %cst_8 [2] : vector<2x8x8xf32> to vector<2x8xf32>
    %25 = vector.shape_cast %24 : vector<2x8xf32> to vector<2x8x1xf32>
    %26 = tpu.reciprocal %25 {approx = true} : vector<2x8x1xf32> -> vector<2x8x1xf32>
    %27 = vector.broadcast %26 : vector<2x8x1xf32> to vector<2x8x8xf32>
    %28 = arith.mulf %23, %27 : vector<2x8x8xf32>
    "tpu.trace_start"() <{level = 10 : i32, message = "bqk,bkh->bqh"}> : () -> ()
    %cst_9 = arith.constant dense<0.000000e+00> : vector<2x8x16xf32>
    %29 = tpu.matmul %28, %6, %cst_9 {dimension_numbers = #tpu.dot_dimension_numbers<[2], [1], [1], [2], [0, 0, 0, 1, 1, 2], [0], [0]>} : vector<2x8x8xf32>, vector<2x8x16xf32>, vector<2x8x16xf32> -> vector<2x8x16xf32>
    "tpu.trace_stop"() : () -> ()
    %30 = vector.extract_strided_slice %29 {offsets = [0, 0, 0], sizes = [2, 1, 16], strides = [1, 1, 1]} : vector<2x8x16xf32> to vector<2x1x16xf32>
    %31 = vector.shape_cast %30 : vector<2x1x16xf32> to vector<2x16xf32>
    %c0_10 = arith.constant 0 : index
    %c0_11 = arith.constant 0 : index
    %32 = vector.load %arg3[%c0_10, %c0_11] : memref<2x128xf32, #tpu.memory_space<vmem>>, vector<2x16xf32>
    tpu.vector_store %arg3[%c0_10, %c0_11], %31 {strides = array<i32>} : memref<2x128xf32, #tpu.memory_space<vmem>>, vector<2x16xf32>,
    %33 = vector.extract_strided_slice %29 {offsets = [0, 1, 0], sizes = [2, 1, 16], strides = [1, 1, 1]} : vector<2x8x16xf32> to vector<2x1x16xf32>
    %34 = vector.shape_cast %33 : vector<2x1x16xf32> to vector<2x16xf32>
    %c0_12 = arith.constant 0 : index
    %c16 = arith.constant 16 : index
    %35 = vector.load %arg3[%c0_12, %c16] : memref<2x128xf32, #tpu.memory_space<vmem>>, vector<2x16xf32>
    tpu.vector_store %arg3[%c0_12, %c16], %34 {strides = array<i32>} : memref<2x128xf32, #tpu.memory_space<vmem>>, vector<2x16xf32>,
    %36 = vector.extract_strided_slice %29 {offsets = [0, 2, 0], sizes = [2, 1, 16], strides = [1, 1, 1]} : vector<2x8x16xf32> to vector<2x1x16xf32>
    %37 = vector.shape_cast %36 : vector<2x1x16xf32> to vector<2x16xf32>
    %c0_13 = arith.constant 0 : index
    %c32 = arith.constant 32 : index
    %38 = vector.load %arg3[%c0_13, %c32] : memref<2x128xf32, #tpu.memory_space<vmem>>, vector<2x16xf32>
    tpu.vector_store %arg3[%c0_13, %c32], %37 {strides = array<i32>} : memref<2x128xf32, #tpu.memory_space<vmem>>, vector<2x16xf32>,
    %39 = vector.extract_strided_slice %29 {offsets = [0, 3, 0], sizes = [2, 1, 16], strides = [1, 1, 1]} : vector<2x8x16xf32> to vector<2x1x16xf32>
    %40 = vector.shape_cast %39 : vector<2x1x16xf32> to vector<2x16xf32>
    %c0_14 = arith.constant 0 : index
    %c48 = arith.constant 48 : index
    %41 = vector.load %arg3[%c0_14, %c48] : memref<2x128xf32, #tpu.memory_space<vmem>>, vector<2x16xf32>
    tpu.vector_store %arg3[%c0_14, %c48], %40 {strides = array<i32>} : memref<2x128xf32, #tpu.memory_space<vmem>>, vector<2x16xf32>,
    %42 = vector.extract_strided_slice %29 {offsets = [0, 4, 0], sizes = [2, 1, 16], strides = [1, 1, 1]} : vector<2x8x16xf32> to vector<2x1x16xf32>
    %43 = vector.shape_cast %42 : vector<2x1x16xf32> to vector<2x16xf32>
    %c0_15 = arith.constant 0 : index
    %c64 = arith.constant 64 : index
    %44 = vector.load %arg3[%c0_15, %c64] : memref<2x128xf32, #tpu.memory_space<vmem>>, vector<2x16xf32>
    tpu.vector_store %arg3[%c0_15, %c64], %43 {strides = array<i32>} : memref<2x128xf32, #tpu.memory_space<vmem>>, vector<2x16xf32>,
    %45 = vector.extract_strided_slice %29 {offsets = [0, 5, 0], sizes = [2, 1, 16], strides = [1, 1, 1]} : vector<2x8x16xf32> to vector<2x1x16xf32>
    %46 = vector.shape_cast %45 : vector<2x1x16xf32> to vector<2x16xf32>
    %c0_16 = arith.constant 0 : index
    %c80 = arith.constant 80 : index
    %47 = vector.load %arg3[%c0_16, %c80] : memref<2x128xf32, #tpu.memory_space<vmem>>, vector<2x16xf32>
    tpu.vector_store %arg3[%c0_16, %c80], %46 {strides = array<i32>} : memref<2x128xf32, #tpu.memory_space<vmem>>, vector<2x16xf32>,
    %48 = vector.extract_strided_slice %29 {offsets = [0, 6, 0], sizes = [2, 1, 16], strides = [1, 1, 1]} : vector<2x8x16xf32> to vector<2x1x16xf32>
    %49 = vector.shape_cast %48 : vector<2x1x16xf32> to vector<2x16xf32>
    %c0_17 = arith.constant 0 : index
    %c96 = arith.constant 96 : index
    %50 = vector.load %arg3[%c0_17, %c96] : memref<2x128xf32, #tpu.memory_space<vmem>>, vector<2x16xf32>
    tpu.vector_store %arg3[%c0_17, %c96], %49 {strides = array<i32>} : memref<2x128xf32, #tpu.memory_space<vmem>>, vector<2x16xf32>,
    %51 = vector.extract_strided_slice %29 {offsets = [0, 7, 0], sizes = [2, 1, 16], strides = [1, 1, 1]} : vector<2x8x16xf32> to vector<2x1x16xf32>
    %52 = vector.shape_cast %51 : vector<2x1x16xf32> to vector<2x16xf32>
    %c0_18 = arith.constant 0 : index
    %c112 = arith.constant 112 : index
    %53 = vector.load %arg3[%c0_18, %c112] : memref<2x128xf32, #tpu.memory_space<vmem>>, vector<2x16xf32>
    tpu.vector_store %arg3[%c0_18, %c112], %52 {strides = array<i32>} : memref<2x128xf32, #tpu.memory_space<vmem>>, vector<2x16xf32>,
    return
  }
  func.func @transform_0(%arg0: i32) -> (i32, i32) {
    %c0_i32 = arith.constant 0 : i32
    %c0_i32_0 = arith.constant 0 : i32
    return %arg0, %c0_i32 : i32, i32
  }
  func.func @transform_1(%arg0: i32) -> (i32, i32) {
    %c0_i32 = arith.constant 0 : i32
    %c0_i32_0 = arith.constant 0 : i32
    %c0_i32_1 = arith.constant 0 : i32
    return %c0_i32, %c0_i32_0 : i32, i32
  }
  func.func @transform_2(%arg0: i32) -> (i32, i32) {
    %c0_i32 = arith.constant 0 : i32
    %c0_i32_0 = arith.constant 0 : i32
    return %arg0, %c0_i32 : i32, i32
  }
}

</mosaic_0001>

<llo_original>
// kernel: tpu_custom_call.1
$region0: #{tpu_custom_call.1}
  #allocation0 [shape = 'u32[]', space=smem, size = 0x4, offset = 0x4, fixed_abs, tag = 'smem constant byte address 0x4 - core index']
  #allocation1 [shape = 'u32[144,128]{1,0:T(1,128)}', space=vmem, size = 0x12000, scoped, tag = 'internal scratch']
  %s0 = inlined_call_operand.hbm [shape: f32[16,32], index: 0, kind: input, shape index: {}]
  %s1 = inlined_call_operand.hbm [shape: f32[32,48], index: 1, kind: input, shape index: {}]
  %s2 = inlined_call_operand.hbm [shape: f32[2,128], index: 2, kind: output, shape index: {}]
  %s3 = sld [smem:[#allocation0]]
  $region26: #{tpu_custom_call.1} parent=0
    _
  %s5 = ssub.s32 1, %s3
  %s6 = scalar_select 0, %s5, %s3
  $region1: #{tpu_custom_call.1} parent=0
    #allocation2 [shape = 'u8[8192]{0}', space=vmem, size = 0x2000, scoped, tag = 'input window, operand 0, single buffered']
    #allocation3 [shape = 's32[1]{0}', space=sflag, size = 0x4, scoped, tag = 'scoped memory for tpu_custom_call.1']
    #allocation4 [shape = 's32[1]{0}', space=sflag, size = 0x4, scoped, tag = 'scoped memory for tpu_custom_call.1']
    #allocation5 [shape = 'u8[16384]{0}', space=vmem, size = 0x4000, scoped, tag = 'input window, operand 1, single buffered']
    #allocation6 [shape = 's32[1]{0}', space=sflag, size = 0x4, scoped, tag = 'scoped memory for tpu_custom_call.1']
    #allocation7 [shape = 'u8[1024]{0}', space=vmem, size = 0x400, scoped, tag = 'output window, operand 0, single buffered']
    %7 = vsyncpa [#allocation3], 0
    %8 = vsyncpa [#allocation6], 0
    %9 = vsyncpa [#allocation4], 0
    // Predicated region
    $region2: #{tpu_custom_call.1} parent=1 // pred_check
      _
    $region3: #{tpu_custom_call.1} parent=1 // pred_check_branch
      %11 = sbr.rel (0) target = $region5
    $region4: #{tpu_custom_call.1} parent=1 // pred_region
      %s13 = ssub.s32 256, 256
      %14 = vsyncadd [#allocation3], %s13
      %s15 = sshll.u32 [#allocation2], 4
      %s16 = int_to_ptr.vmem [resolvable:$true] %s15
      %21 = dma.hbm_to_vmem [thread:$0]  %s0, 256, %s16, [#allocation3], 128, 128, 8
    $region5: #{tpu_custom_call.1} parent=1 // pred_fallthru
      _
    // Predicated region
    $region6: #{tpu_custom_call.1} parent=1 // pred_check
      _
    $region7: #{tpu_custom_call.1} parent=1 // pred_check_branch
      %23 = sbr.rel (0) target = $region9
    $region8: #{tpu_custom_call.1} parent=1 // pred_region
      %s25 = ssub.s32 512, 512
      %26 = vsyncadd [#allocation6], %s25
      %s27 = sshll.u32 [#allocation5], 4
      %s28 = int_to_ptr.vmem [resolvable:$true] %s27
      %33 = dma.hbm_to_vmem [thread:$0]  %s1, 512, %s28, [#allocation6], 128, 128, 8
    $region9: #{tpu_custom_call.1} parent=1 // pred_fallthru
      _
    // Predicated region
    $region10: #{tpu_custom_call.1} parent=1 // pred_check
      _
    $region11: #{tpu_custom_call.1} parent=1 // pred_check_branch
      %35 = sbr.rel (0) target = $region13
    $region12: #{tpu_custom_call.1} parent=1 // pred_region
      %36 = dma.done [#allocation3], 256
    $region13: #{tpu_custom_call.1} parent=1 // pred_fallthru
      _
    // Predicated region
    $region14: #{tpu_custom_call.1} parent=1 // pred_check
      _
    $region15: #{tpu_custom_call.1} parent=1 // pred_check_branch
      %38 = sbr.rel (0) target = $region17
    $region16: #{tpu_custom_call.1} parent=1 // pred_region
      %39 = dma.done [#allocation6], 512
    $region17: #{tpu_custom_call.1} parent=1 // pred_fallthru
      _
    %v40 = vld [vmem:[#allocation2] sm:$0xff]
    %v41 = vld [vmem:[#allocation2 + $0x8] sm:$0xff]
    %v42 = vld [vmem:[#allocation5] sm:$0xff]
    %v43 = vld [vmem:[#allocation5 + $0x8] sm:$0xff]
    %v44 = vld [vmem:[#allocation5 + $0x10] sm:$0xff]
    %v45 = vld [vmem:[#allocation5 + $0x18] sm:$0xff]
    %vm46 = vcmask 261120
    %v48 = vsel %vm46, %v40, 0
    %v51 = vsel %vm46, %v41, 0
    %53 = vmatprep.subr.mxu0 0.0
    %54 = vmatpush1.msra.mxu0 %v42
    %55 = vmatprep.subr.mxu0 0.0
    %56 = vmatpush1.msra.mxu0 %v43
    %57 = vmatprep.subr.mxu0 0.0
    %58 = vmatpush1.msra.mxu0 %v44
    %59 = vmatprep.subr.mxu0 0.0
    %60 = vmatpush1.msra.mxu0 %v45
    %61 = vmatprep.subr.mxu0 0.0
    %62 = vmatpush1.msra.mxu0 0.0
    %63 = vmatprep.subr.mxu0 0.0
    %64 = vmatpush1.msra.mxu0 0.0
    %65 = vmatprep.subr.mxu0 0.0
    %66 = vmatpush1.msra.mxu0 0.0
    %67 = vmatprep.subr.mxu0 0.0
    %68 = vmatpush1.msra.mxu0 0.0
    %69 = vmatprep.subr.mxu0 0.0
    %70 = vmatpush1.msra.mxu0 0.0
    %71 = vmatprep.subr.mxu0 0.0
    %72 = vmatpush1.msra.mxu0 0.0
    %73 = vmatprep.subr.mxu0 0.0
    %74 = vmatpush1.msra.mxu0 0.0
    %75 = vmatprep.subr.mxu0 0.0
    %76 = vmatpush1.msra.mxu0 0.0
    %77 = vmatprep.subr.mxu0 0.0
    %78 = vmatpush1.msra.mxu0 0.0
    %79 = vmatprep.subr.mxu0 0.0
    %80 = vmatpush1.msra.mxu0 0.0
    %81 = vmatprep.subr.mxu0 0.0
    %82 = vmatpush1.msra.mxu0 0.0
    %83 = vmatprep.subr.mxu0 0.0
    %84 = vmatpush1.msra.mxu0 0.0
    %85 = vmatprep.subr.mxu0 0.0
    %86 = vmatpush1.msra.mxu0 0.0
    %87 = vmatprep.subr.mxu0 0.0
    %88 = vmatpush1.msra.mxu0 0.0
    %89 = vmatprep.subr.mxu0 0.0
    %90 = vmatpush1.msra.mxu0 0.0
    %91 = vmatprep.subr.mxu0 0.0
    %92 = vmatpush1.msra.mxu0 0.0
    %93 = vmatprep.subr.mxu0 0.0
    %94 = vmatpush1.msra.mxu0 0.0
    %95 = vmatprep.subr.mxu0 0.0
    %96 = vmatpush1.msra.mxu0 0.0
    %97 = vmatprep.subr.mxu0 0.0
    %98 = vmatpush1.msra.mxu0 0.0
    %99 = vmatprep.subr.mxu0 0.0
    %100 = vmatpush1.msra.mxu0 0.0
    %101 = vmatprep.subr.mxu0 0.0
    %102 = vmatpush1.msra.mxu0 0.0
    %103 = vmatprep.subr.mxu0 0.0
    %104 = vmatpush1.msra.mxu0 0.0
    %105 = vmatprep.subr.mxu0 0.0
    %106 = vmatpush1.msra.mxu0 0.0
    %107 = vmatprep.subr.mxu0 0.0
    %108 = vmatpush1.msra.mxu0 0.0
    %109 = vmatprep.subr.mxu0 0.0
    %110 = vmatpush1.msra.mxu0 0.0
    %111 = vmatprep.subr.mxu0 0.0
    %112 = vmatpush1.msra.mxu0 0.0
    %113 = vmatprep.subr.mxu0 0.0
    %114 = vmatpush1.msra.mxu0 0.0
    %115 = vmatprep.subr.mxu0 0.0
    %116 = vmatpush1.msra.mxu0 0.0
    %117 = vmatprep.mubr.f32.mxu0 0.0
    %118 = vmatmul.mubr.f32.gmra.mrb[0].mxu0 %v48
    %v119 = vpop.f32.mrb[0].mxu0
    %v120 = vadd.f32 0.0, %v119
    %v121 = vpop.f32.mrb[0].mxu0
    %122 = vmatprep.mubr.f32.mxu0 0.0
    %123 = vmatmul.mubr.f32.gmra.mrb[0].mxu0 %v51
    %v124 = vpop.f32.mrb[0].mxu0
    %v125 = vadd.f32 0.0, %v124
    %v126 = vpop.f32.mrb[0].mxu0
    %127 = vdwg.mxu0
    %129 = vrot.lane.b32.xlu0 %v120, 112
    %v130 = vpop.permute.xlu0 %129
    %vm131 = vcmask 130048
    %v132 = vsel %vm131, %v130, 0
    %v134 = vsel %vm131, %v120, 0
    %136 = vmatprep.subr.mxu0 0.0
    %137 = vmatpush1.xpose.msra.mxu0 %v134
    %138 = vmatprep.subr.mxu0 0.0
    %139 = vmatpush1.xpose.msra.mxu0 0.0
    %140 = vmatprep.subr.mxu0 0.0
    %141 = vmatpush1.xpose.msra.mxu0 0.0
    %142 = vmatprep.subr.mxu0 0.0
    %143 = vmatpush1.xpose.msra.mxu0 0.0
    %144 = vmatprep.subr.mxu0 0.0
    %145 = vmatpush1.xpose.msra.mxu0 0.0
    %146 = vmatprep.subr.mxu0 0.0
    %147 = vmatpush1.xpose.msra.mxu0 0.0
    %148 = vmatprep.subr.mxu0 0.0
    %149 = vmatpush1.xpose.msra.mxu0 0.0
    %150 = vmatprep.subr.mxu0 0.0
    %151 = vmatpush1.xpose.msra.mxu0 0.0
    %152 = vmatprep.subr.mxu0 0.0
    %153 = vmatpush1.xpose.msra.mxu0 0.0
    %154 = vmatprep.subr.mxu0 0.0
    %155 = vmatpush1.xpose.msra.mxu0 0.0
    %156 = vmatprep.subr.mxu0 0.0
    %157 = vmatpush1.xpose.msra.mxu0 0.0
    %158 = vmatprep.subr.mxu0 0.0
    %159 = vmatpush1.xpose.msra.mxu0 0.0
    %160 = vmatprep.subr.mxu0 0.0
    %161 = vmatpush1.xpose.msra.mxu0 0.0
    %162 = vmatprep.subr.mxu0 0.0
    %163 = vmatpush1.xpose.msra.mxu0 0.0
    %164 = vmatprep.subr.mxu0 0.0
    %165 = vmatpush1.xpose.msra.mxu0 0.0
    %166 = vmatprep.subr.mxu0 0.0
    %167 = vmatpush1.xpose.msra.mxu0 0.0
    %168 = vmatprep.subr.mxu0 0.0
    %169 = vmatpush1.xpose.msra.mxu0 0.0
    %170 = vmatprep.subr.mxu0 0.0
    %171 = vmatpush1.xpose.msra.mxu0 0.0
    %172 = vmatprep.subr.mxu0 0.0
    %173 = vmatpush1.xpose.msra.mxu0 0.0
    %174 = vmatprep.subr.mxu0 0.0
    %175 = vmatpush1.xpose.msra.mxu0 0.0
    %176 = vmatprep.subr.mxu0 0.0
    %177 = vmatpush1.xpose.msra.mxu0 0.0
    %178 = vmatprep.subr.mxu0 0.0
    %179 = vmatpush1.xpose.msra.mxu0 0.0
    %180 = vmatprep.subr.mxu0 0.0
    %181 = vmatpush1.xpose.msra.mxu0 0.0
    %182 = vmatprep.subr.mxu0 0.0
    %183 = vmatpush1.xpose.msra.mxu0 0.0
    %184 = vmatprep.subr.mxu0 0.0
    %185 = vmatpush1.xpose.msra.mxu0 0.0
    %186 = vmatprep.subr.mxu0 0.0
    %187 = vmatpush1.xpose.msra.mxu0 0.0
    %188 = vmatprep.subr.mxu0 0.0
    %189 = vmatpush1.xpose.msra.mxu0 0.0
    %190 = vmatprep.subr.mxu0 0.0
    %191 = vmatpush1.xpose.msra.mxu0 0.0
    %192 = vmatprep.subr.mxu0 0.0
    %193 = vmatpush1.xpose.msra.mxu0 0.0
    %194 = vmatprep.subr.mxu0 0.0
    %195 = vmatpush1.xpose.msra.mxu0 0.0
    %196 = vmatprep.subr.mxu0 0.0
    %197 = vmatpush1.xpose.msra.mxu0 0.0
    %198 = vmatprep.subr.mxu0 0.0
    %199 = vmatpush1.xpose.msra.mxu0 0.0
    %200 = vmatprep.mubr.f32.mxu0 0.0
    %201 = vmatmul.mubr.f32.gmra.mrb[0].mxu0 %v132
    %v202 = vpop.f32.mrb[0].mxu0
    %v203 = vadd.f32 0.0, %v202
    %v204 = vpop.f32.mrb[0].mxu0
    %205 = vdwg.mxu0
    %207 = vrot.lane.b32.xlu0 %v125, 112
    %v208 = vpop.permute.xlu0 %207
    %v209 = vsel %vm131, %v208, 0
    %v211 = vsel %vm131, %v125, 0
    %213 = vmatprep.subr.mxu0 0.0
    %214 = vmatpush1.xpose.msra.mxu0 %v211
    %215 = vmatprep.subr.mxu0 0.0
    %216 = vmatpush1.xpose.msra.mxu0 0.0
    %217 = vmatprep.subr.mxu0 0.0
    %218 = vmatpush1.xpose.msra.mxu0 0.0
    %219 = vmatprep.subr.mxu0 0.0
    %220 = vmatpush1.xpose.msra.mxu0 0.0
    %221 = vmatprep.subr.mxu0 0.0
    %222 = vmatpush1.xpose.msra.mxu0 0.0
    %223 = vmatprep.subr.mxu0 0.0
    %224 = vmatpush1.xpose.msra.mxu0 0.0
    %225 = vmatprep.subr.mxu0 0.0
    %226 = vmatpush1.xpose.msra.mxu0 0.0
    %227 = vmatprep.subr.mxu0 0.0
    %228 = vmatpush1.xpose.msra.mxu0 0.0
    %229 = vmatprep.subr.mxu0 0.0
    %230 = vmatpush1.xpose.msra.mxu0 0.0
    %231 = vmatprep.subr.mxu0 0.0
    %232 = vmatpush1.xpose.msra.mxu0 0.0
    %233 = vmatprep.subr.mxu0 0.0
    %234 = vmatpush1.xpose.msra.mxu0 0.0
    %235 = vmatprep.subr.mxu0 0.0
    %236 = vmatpush1.xpose.msra.mxu0 0.0
    %237 = vmatprep.subr.mxu0 0.0
    %238 = vmatpush1.xpose.msra.mxu0 0.0
    %239 = vmatprep.subr.mxu0 0.0
    %240 = vmatpush1.xpose.msra.mxu0 0.0
    %241 = vmatprep.subr.mxu0 0.0
    %242 = vmatpush1.xpose.msra.mxu0 0.0
    %243 = vmatprep.subr.mxu0 0.0
    %244 = vmatpush1.xpose.msra.mxu0 0.0
    %245 = vmatprep.subr.mxu0 0.0
    %246 = vmatpush1.xpose.msra.mxu0 0.0
    %247 = vmatprep.subr.mxu0 0.0
    %248 = vmatpush1.xpose.msra.mxu0 0.0
    %249 = vmatprep.subr.mxu0 0.0
    %250 = vmatpush1.xpose.msra.mxu0 0.0
    %251 = vmatprep.subr.mxu0 0.0
    %252 = vmatpush1.xpose.msra.mxu0 0.0
    %253 = vmatprep.subr.mxu0 0.0
    %254 = vmatpush1.xpose.msra.mxu0 0.0
    %255 = vmatprep.subr.mxu0 0.0
    %256 = vmatpush1.xpose.msra.mxu0 0.0
    %257 = vmatprep.subr.mxu0 0.0
    %258 = vmatpush1.xpose.msra.mxu0 0.0
    %259 = vmatprep.subr.mxu0 0.0
    %260 = vmatpush1.xpose.msra.mxu0 0.0
    %261 = vmatprep.subr.mxu0 0.0
    %262 = vmatpush1.xpose.msra.mxu0 0.0
    %263 = vmatprep.subr.mxu0 0.0
    %264 = vmatpush1.xpose.msra.mxu0 0.0
    %265 = vmatprep.subr.mxu0 0.0
    %266 = vmatpush1.xpose.msra.mxu0 0.0
    %267 = vmatprep.subr.mxu0 0.0
    %268 = vmatpush1.xpose.msra.mxu0 0.0
    %269 = vmatprep.subr.mxu0 0.0
    %270 = vmatpush1.xpose.msra.mxu0 0.0
    %271 = vmatprep.subr.mxu0 0.0
    %272 = vmatpush1.xpose.msra.mxu0 0.0
    %273 = vmatprep.subr.mxu0 0.0
    %274 = vmatpush1.xpose.msra.mxu0 0.0
    %275 = vmatprep.subr.mxu0 0.0
    %276 = vmatpush1.xpose.msra.mxu0 0.0
    %277 = vmatprep.mubr.f32.mxu0 0.0
    %278 = vmatmul.mubr.f32.gmra.mrb[0].mxu0 %v209
    %v279 = vpop.f32.mrb[0].mxu0
    %v280 = vadd.f32 0.0, %v279
    %v281 = vpop.f32.mrb[0].mxu0
    %282 = vdwg.mxu0
    %v283 = vmul.f32 %v203, 0.17677669
    %v284 = vmul.f32 %v280, 0.17677669
    %v285 = vlaneseq
    %v286 = vshrl.u32 %v285, 7
    %v287 = vlaneseq
    %v288 = vand.u32 %v287, 127
    %vm289 = vcmp.le.s32.totalorder %v288, %v286
    %v290 = vsel %vm289, 1, 0
    %vm291 = vcmp.eq.s32.totalorder %v290, 1
    %v292 = vsel %vm291, %v283, -1e+30
    %v293 = vsel %vm291, %v284, -1e+30
    %vm294 = vcmask 64512
    %v295 = vsel %vm294, %v292, -inf
    %296 = vmax.xlane.f32.xlu0 %v295
    %v297 = vpop.xlane.xlu0 %296
    %v298 = vsel %vm294, %v293, -inf
    %299 = vmax.xlane.f32.xlu0 %v298
    %v300 = vpop.xlane.xlu0 %299
    %v301 = vsub.f32 %v292, %v297
    %v302 = vsub.f32 %v293, %v300
    %v303 = vmul.f32 %v301, 1.442695
    %v304 = vpow.pop %v303
    %v305 = vmul.f32 %v302, 1.442695
    %v306 = vpow.pop %v305
    %v307 = vsel %vm294, %v304, 0.0
    %308 = vadd.xlane.f32.xlu0 %v307
    %v309 = vpop.xlane.xlu0 %308
    %v310 = vsel %vm294, %v306, 0.0
    %311 = vadd.xlane.f32.xlu0 %v310
    %v312 = vpop.xlane.xlu0 %311
    %v313 = vrcp.pop %v309
    %v314 = vrcp.pop %v312
    %v315 = vmul.f32 %v304, %v313
    %v316 = vmul.f32 %v306, %v314
    %317 = vrot.lane.b32.xlu0 %v120, 96
    %v318 = vpop.permute.xlu0 %317
    %v321 = vsel %vm294, %v315, 0
    %323 = vmatprep.subr.mxu0 0.0
    %324 = vmatpush1.msra.mxu0 %v318
    %325 = vmatprep.subr.mxu0 0.0
    %326 = vmatpush1.msra.mxu0 0.0
    %327 = vmatprep.subr.mxu0 0.0
    %328 = vmatpush1.msra.mxu0 0.0
    %329 = vmatprep.subr.mxu0 0.0
    %330 = vmatpush1.msra.mxu0 0.0
    %331 = vmatprep.subr.mxu0 0.0
    %332 = vmatpush1.msra.mxu0 0.0
    %333 = vmatprep.subr.mxu0 0.0
    %334 = vmatpush1.msra.mxu0 0.0
    %335 = vmatprep.subr.mxu0 0.0
    %336 = vmatpush1.msra.mxu0 0.0
    %337 = vmatprep.subr.mxu0 0.0
    %338 = vmatpush1.msra.mxu0 0.0
    %339 = vmatprep.subr.mxu0 0.0
    %340 = vmatpush1.msra.mxu0 0.0
    %341 = vmatprep.subr.mxu0 0.0
    %342 = vmatpush1.msra.mxu0 0.0
    %343 = vmatprep.subr.mxu0 0.0
    %344 = vmatpush1.msra.mxu0 0.0
    %345 = vmatprep.subr.mxu0 0.0
    %346 = vmatpush1.msra.mxu0 0.0
    %347 = vmatprep.subr.mxu0 0.0
    %348 = vmatpush1.msra.mxu0 0.0
    %349 = vmatprep.subr.mxu0 0.0
    %350 = vmatpush1.msra.mxu0 0.0
    %351 = vmatprep.subr.mxu0 0.0
    %352 = vmatpush1.msra.mxu0 0.0
    %353 = vmatprep.subr.mxu0 0.0
    %354 = vmatpush1.msra.mxu0 0.0
    %355 = vmatprep.subr.mxu0 0.0
    %356 = vmatpush1.msra.mxu0 0.0
    %357 = vmatprep.subr.mxu0 0.0
    %358 = vmatpush1.msra.mxu0 0.0
    %359 = vmatprep.subr.mxu0 0.0
    %360 = vmatpush1.msra.mxu0 0.0
    %361 = vmatprep.subr.mxu0 0.0
    %362 = vmatpush1.msra.mxu0 0.0
    %363 = vmatprep.subr.mxu0 0.0
    %364 = vmatpush1.msra.mxu0 0.0
    %365 = vmatprep.subr.mxu0 0.0
    %366 = vmatpush1.msra.mxu0 0.0
    %367 = vmatprep.subr.mxu0 0.0
    %368 = vmatpush1.msra.mxu0 0.0
    %369 = vmatprep.subr.mxu0 0.0
    %370 = vmatpush1.msra.mxu0 0.0
    %371 = vmatprep.subr.mxu0 0.0
    %372 = vmatpush1.msra.mxu0 0.0
    %373 = vmatprep.subr.mxu0 0.0
    %374 = vmatpush1.msra.mxu0 0.0
    %375 = vmatprep.subr.mxu0 0.0
    %376 = vmatpush1.msra.mxu0 0.0
    %377 = vmatprep.subr.mxu0 0.0
    %378 = vmatpush1.msra.mxu0 0.0
    %379 = vmatprep.subr.mxu0 0.0
    %380 = vmatpush1.msra.mxu0 0.0
    %381 = vmatprep.subr.mxu0 0.0
    %382 = vmatpush1.msra.mxu0 0.0
    %383 = vmatprep.subr.mxu0 0.0
    %384 = vmatpush1.msra.mxu0 0.0
    %385 = vmatprep.subr.mxu0 0.0
    %386 = vmatpush1.msra.mxu0 0.0
    %387 = vmatprep.mubr.f32.mxu0 0.0
    %388 = vmatmul.mubr.f32.gmra.mrb[0].mxu0 %v321
    %v389 = vpop.f32.mrb[0].mxu0
    %v390 = vadd.f32 0.0, %v389
    %v391 = vpop.f32.mrb[0].mxu0
    %392 = vdwg.mxu0
    %393 = vrot.lane.b32.xlu0 %v125, 96
    %v394 = vpop.permute.xlu0 %393
    %v397 = vsel %vm294, %v316, 0
    %399 = vmatprep.subr.mxu0 0.0
    %400 = vmatpush1.msra.mxu0 %v394
    %401 = vmatprep.subr.mxu0 0.0
    %402 = vmatpush1.msra.mxu0 0.0
    %403 = vmatprep.subr.mxu0 0.0
    %404 = vmatpush1.msra.mxu0 0.0
    %405 = vmatprep.subr.mxu0 0.0
    %406 = vmatpush1.msra.mxu0 0.0
    %407 = vmatprep.subr.mxu0 0.0
    %408 = vmatpush1.msra.mxu0 0.0
    %409 = vmatprep.subr.mxu0 0.0
    %410 = vmatpush1.msra.mxu0 0.0
    %411 = vmatprep.subr.mxu0 0.0
    %412 = vmatpush1.msra.mxu0 0.0
    %413 = vmatprep.subr.mxu0 0.0
    %414 = vmatpush1.msra.mxu0 0.0
    %415 = vmatprep.subr.mxu0 0.0
    %416 = vmatpush1.msra.mxu0 0.0
    %417 = vmatprep.subr.mxu0 0.0
    %418 = vmatpush1.msra.mxu0 0.0
    %419 = vmatprep.subr.mxu0 0.0
    %420 = vmatpush1.msra.mxu0 0.0
    %421 = vmatprep.subr.mxu0 0.0
    %422 = vmatpush1.msra.mxu0 0.0
    %423 = vmatprep.subr.mxu0 0.0
    %424 = vmatpush1.msra.mxu0 0.0
    %425 = vmatprep.subr.mxu0 0.0
    %426 = vmatpush1.msra.mxu0 0.0
    %427 = vmatprep.subr.mxu0 0.0
    %428 = vmatpush1.msra.mxu0 0.0
    %429 = vmatprep.subr.mxu0 0.0
    %430 = vmatpush1.msra.mxu0 0.0
    %431 = vmatprep.subr.mxu0 0.0
    %432 = vmatpush1.msra.mxu0 0.0
    %433 = vmatprep.subr.mxu0 0.0
    %434 = vmatpush1.msra.mxu0 0.0
    %435 = vmatprep.subr.mxu0 0.0
    %436 = vmatpush1.msra.mxu0 0.0
    %437 = vmatprep.subr.mxu0 0.0
    %438 = vmatpush1.msra.mxu0 0.0
    %439 = vmatprep.subr.mxu0 0.0
    %440 = vmatpush1.msra.mxu0 0.0
    %441 = vmatprep.subr.mxu0 0.0
    %442 = vmatpush1.msra.mxu0 0.0
    %443 = vmatprep.subr.mxu0 0.0
    %444 = vmatpush1.msra.mxu0 0.0
    %445 = vmatprep.subr.mxu0 0.0
    %446 = vmatpush1.msra.mxu0 0.0
    %447 = vmatprep.subr.mxu0 0.0
    %448 = vmatpush1.msra.mxu0 0.0
    %449 = vmatprep.subr.mxu0 0.0
    %450 = vmatpush1.msra.mxu0 0.0
    %451 = vmatprep.subr.mxu0 0.0
    %452 = vmatpush1.msra.mxu0 0.0
    %453 = vmatprep.subr.mxu0 0.0
    %454 = vmatpush1.msra.mxu0 0.0
    %455 = vmatprep.subr.mxu0 0.0
    %456 = vmatpush1.msra.mxu0 0.0
    %457 = vmatprep.subr.mxu0 0.0
    %458 = vmatpush1.msra.mxu0 0.0
    %459 = vmatprep.subr.mxu0 0.0
    %460 = vmatpush1.msra.mxu0 0.0
    %461 = vmatprep.subr.mxu0 0.0
    %462 = vmatpush1.msra.mxu0 0.0
    %463 = vmatprep.mubr.f32.mxu0 0.0
    %464 = vmatmul.mubr.f32.gmra.mrb[0].mxu0 %v397
    %v465 = vpop.f32.mrb[0].mxu0
    %v466 = vadd.f32 0.0, %v465
    %v467 = vpop.f32.mrb[0].mxu0
    %468 = vdwg.mxu0
    %v471 = vrot.slane %v466, 7
    %vm472 = vcmask 1041409
    %v473 = vsel %vm472, %v471, %v390
    %vm475 = vcmask 123904
    %476 = vst.msk [vmem:[#allocation7] sm:$0x3] %vm475, %v473
    %vm477 = vcmask 1042434
    %v478 = vsel %vm477, %v471, %v390
    %479 = vrot.lane.b32.xlu0 %v478, 16
    %v480 = vpop.permute.xlu0 %479
    %vm482 = vcmask 256129
    %483 = vst.msk [vmem:[#allocation7 - $0x1] sm:$0x6] %vm482, %v480
    %vm484 = vcmask 1043459
    %v485 = vsel %vm484, %v471, %v390
    %486 = vrot.lane.b32.xlu0 %v485, 32
    %v487 = vpop.permute.xlu0 %486
    %vm489 = vcmask 388354
    %490 = vst.msk [vmem:[#allocation7 - $0x2] sm:$0xc] %vm489, %v487
    %vm491 = vcmask 1044484
    %v492 = vsel %vm491, %v471, %v390
    %493 = vrot.lane.b32.xlu0 %v492, 48
    %v494 = vpop.permute.xlu0 %493
    %vm496 = vcmask 520579
    %497 = vst.msk [vmem:[#allocation7 - $0x3] sm:$0x18] %vm496, %v494
    %vm498 = vcmask 1045509
    %v499 = vsel %vm498, %v471, %v390
    %500 = vrot.lane.b32.xlu0 %v499, 64
    %v501 = vpop.permute.xlu0 %500
    %vm503 = vcmask 652804
    %504 = vst.msk [vmem:[#allocation7 - $0x4] sm:$0x30] %vm503, %v501
    %vm505 = vcmask 1046534
    %v506 = vsel %vm505, %v471, %v390
    %507 = vrot.lane.b32.xlu0 %v506, 80
    %v508 = vpop.permute.xlu0 %507
    %vm510 = vcmask 785029
    %511 = vst.msk [vmem:[#allocation7 - $0x5] sm:$0x60] %vm510, %v508
    %vm512 = vcmask 1047559
    %v513 = vsel %vm512, %v471, %v390
    %514 = vrot.lane.b32.xlu0 %v513, 96
    %v515 = vpop.permute.xlu0 %514
    %vm517 = vcmask 917254
    %518 = vst.msk [vmem:[#allocation7 - $0x6] sm:$0xc0] %vm517, %v515
    %519 = vrot.lane.b32.xlu0 %v390, 112
    %v520 = vpop.permute.xlu0 %519
    %521 = vrot.lane.b32.xlu0 %v471, 112
    %v522 = vpop.permute.xlu0 %521
    %vm525 = vcmask 1048455
    %526 = vst.msk [vmem:[#allocation7 - $0x7] sm:$0x80] %vm525, %v520
    %vm527 = vcmask 1041280
    %528 = vst.msk [vmem:[#allocation7 + $0x1] sm:$0x1] %vm527, %v522
    // Predicated region
    $region18: #{tpu_custom_call.1} parent=1 // pred_check
      _
    $region19: #{tpu_custom_call.1} parent=1 // pred_check_branch
      %530 = sbr.rel (0) target = $region21
    $region20: #{tpu_custom_call.1} parent=1 // pred_region
      %s532 = ssub.s32 32, 32
      %533 = vsyncadd [#allocation4], %s532
      %s535 = sshll.u32 [#allocation7], 4
      %s536 = int_to_ptr.vmem [resolvable:$true] %s535
      %538 = dma.vmem_to_hbm [thread:$0]  %s536, 32, %s2, [#allocation4]
    $region21: #{tpu_custom_call.1} parent=1 // pred_fallthru
      _
    // Predicated region
    $region22: #{tpu_custom_call.1} parent=1 // pred_check
      _
    $region23: #{tpu_custom_call.1} parent=1 // pred_check_branch
      %540 = sbr.rel (0) target = $region25
    $region24: #{tpu_custom_call.1} parent=1 // pred_region
      %541 = dma.done [#allocation4], 32
    $region25: #{tpu_custom_call.1} parent=1 // pred_fallthru
      _
    %542 = vsyncpa [#allocation3], 1
    %543 = vsyncpa [#allocation6], 1
    %544 = vsyncpa [#allocation4], 1

</llo_original>
